<compile_context>
chip_gen: v7x
topology: tpu7x:2x2x1
jax: 0.10.0
libtpu: 0.0.40
codegen_flags: <defaults>
</compile_context>

<pallas_src>
import functools
import math

import jax
import jax.numpy as jnp
from jax.experimental import pallas as pl
from jax.experimental.pallas import tpu as pltpu


def _pos_encoder_kernel(x_ref, pe_ref, o_ref, *, scale):
    # x_ref: (bb, S*D)   pe_ref: (1, S*D) -> broadcasts over the batch sublanes
    o_ref[...] = x_ref[...] * scale + pe_ref[...]


def make_positional_encoding(max_seq_len, d_model):
    """Exact replica of the PyTorch buffer construction."""
    pe = [[0.0] * d_model for _ in range(max_seq_len)]
    for pos in range(max_seq_len):
        for i in range(0, d_model, 2):
            pe[pos][i] = math.sin(pos / 10000 ** (2 * i / d_model))
            pe[pos][i + 1] = math.cos(pos / 10000 ** (2 * (i + 1) / d_model))
    return jnp.asarray(pe, dtype=jnp.float32)          # (max_seq_len, d_model)


def positional_encoder_pallas(x, pe, d_model):
    B, S, D = x.shape
    assert pe.shape[0] >= S and pe.shape[1] == D

    # Batch-chunk size: sublane-aligned (multiple of 8) or the full batch.
    if B >= 16 and B % 16 == 0:
        bb = B // 2          # 2-way grid: lets v7x megacore use both cores
    elif B % 8 == 0:
        bb = 8
    else:
        bb = B               # small batch: single block, no extra grid steps
    num_blocks = B // bb

    # Lane-dense presentation: last dim S*D (>=128-friendly) instead of D.
    x2 = x.reshape(B, S * D)
    pe2 = pe[:S].reshape(1, S * D)
    scale = float(math.sqrt(d_model))

    cost = pl.CostEstimate(
        flops=2 * B * S * D,
        transcendentals=0,
        bytes_accessed=(2 * B * S * D + S * D) * 4,
    )

    kernel = functools.partial(_pos_encoder_kernel, scale=scale)
    out2 = pl.pallas_call(
        kernel,
        out_shape=jax.ShapeDtypeStruct((B, S * D), x.dtype),
        grid=(num_blocks,),
        in_specs=[
            pl.BlockSpec((bb, S * D), lambda b: (b, 0)),  # x   (lane-dense)
            pl.BlockSpec((1, S * D), lambda b: (0, 0)),   # pe  (resident)
        ],
        out_specs=pl.BlockSpec((bb, S * D), lambda b: (b, 0)),
        compiler_params=pltpu.CompilerParams(
            dimension_semantics=("parallel",),
        ),
        cost_estimate=cost,
    )(x2, pe2)

    # TODO(synk): dropout (stochastic) not implemented in-kernel; eval-mode identity.
    return out2.reshape(B, S, D)


# ------------------------- pure-JAX reference -------------------------------
def positional_encoder_ref(x, pe, d_model):
    S = x.shape[1]
    return x * math.sqrt(d_model) + pe[None, :S, :]


if __name__ == "__main__":
    B, S, D_MODEL, MAX_SEQ = 2, 8, 32, 200

    key = jax.random.PRNGKey(0)
    x = jax.random.normal(key, (B, S, D_MODEL), jnp.float32)
    pe = make_positional_encoding(MAX_SEQ, D_MODEL)

    out = positional_encoder_pallas(x, pe, D_MODEL)
    out = jax.block_until_ready(out)

    ref = positional_encoder_ref(x, pe, D_MODEL)
    assert out.shape == (B, S, D_MODEL)
    assert jnp.allclose(out, ref, atol=1e-5, rtol=1e-5), (
        float(jnp.max(jnp.abs(out - ref))))

    print("KERNEL_OK")
</pallas_src>

<mosaic_0001>
module attributes {stable_mosaic.version = 11 : i64} {
  func.func @_pos_encoder_kernel(%arg0: i32, %arg1: memref<2x256xf32, #tpu.memory_space<vmem>>, %arg2: memref<1x256xf32, #tpu.memory_space<vmem>>, %arg3: memref<2x256xf32, #tpu.memory_space<vmem>>) attributes {dimension_semantics = [#tpu.dimension_semantics<parallel>], iteration_bounds = array<i64: 1>, scalar_prefetch = 0 : i64, scratch_operands = 0 : i64, tpu.core_type = #tpu.core_type<tc>, window_params = [{transform_indices = @transform_0, window_bounds = array<i64: 2, 256>}, {pipeline_mode = #tpu.pipeline_mode<synchronous>, transform_indices = @transform_1, window_bounds = array<i64: 1, 256>}, {transform_indices = @transform_2, window_bounds = array<i64: 2, 256>}]} {
    %c0 = arith.constant 0 : index
    %c0_0 = arith.constant 0 : index
    %0 = vector.load %arg1[%c0, %c0_0] : memref<2x256xf32, #tpu.memory_space<vmem>>, vector<2x256xf32>
    %cst = arith.constant 5.65685415 : f32
    %1 = vector.broadcast %cst : f32 to vector<2x256xf32>
    %2 = arith.mulf %0, %1 : vector<2x256xf32>
    %c0_1 = arith.constant 0 : index
    %c0_2 = arith.constant 0 : index
    %3 = vector.load %arg2[%c0_1, %c0_2] : memref<1x256xf32, #tpu.memory_space<vmem>>, vector<1x256xf32>
    %4 = vector.broadcast %3 : vector<1x256xf32> to vector<2x256xf32>
    %5 = arith.addf %2, %4 : vector<2x256xf32>
    %c0_3 = arith.constant 0 : index
    %c0_4 = arith.constant 0 : index
    %6 = vector.load %arg3[%c0_3, %c0_4] : memref<2x256xf32, #tpu.memory_space<vmem>>, vector<2x256xf32>
    tpu.vector_store %arg3[%c0_3, %c0_4], %5 {strides = array<i32>} : memref<2x256xf32, #tpu.memory_space<vmem>>, vector<2x256xf32>,
    return
  }
  func.func @transform_0(%arg0: i32) -> (i32, i32) {
    %c0_i32 = arith.constant 0 : i32
    %c0_i32_0 = arith.constant 0 : i32
    return %arg0, %c0_i32 : i32, i32
  }
  func.func @transform_1(%arg0: i32) -> (i32, i32) {
    %c0_i32 = arith.constant 0 : i32
    %c0_i32_0 = arith.constant 0 : i32
    %c0_i32_1 = arith.constant 0 : i32
    return %c0_i32, %c0_i32_0 : i32, i32
  }
  func.func @transform_2(%arg0: i32) -> (i32, i32) {
    %c0_i32 = arith.constant 0 : i32
    %c0_i32_0 = arith.constant 0 : i32
    return %arg0, %c0_i32 : i32, i32
  }
}

</mosaic_0001>

<llo_original>
// kernel: tpu_custom_call.1
$region0: #{tpu_custom_call.1}
  #allocation0 [shape = 'u32[]', space=smem, size = 0x4, offset = 0x4, fixed_abs, tag = 'smem constant byte address 0x4 - core index']
  #allocation1 [shape = 'u32[144,128]{1,0:T(1,128)}', space=vmem, size = 0x12000, scoped, tag = 'internal scratch']
  %s0 = inlined_call_operand.hbm [shape: f32[2,256], index: 0, kind: input, shape index: {}]
  %s1 = inlined_call_operand.vmem [shape: f32[1,256], index: 1, kind: input, shape index: {}]
  %s2 = inlined_call_operand.hbm [shape: f32[2,256], index: 2, kind: output, shape index: {}]
  %s3 = sld [smem:[#allocation0]]
  $region22: #{tpu_custom_call.1} parent=0
    _
  %s5 = ssub.s32 1, %s3
  %s6 = scalar_select 0, %s5, %s3
  $region1: #{tpu_custom_call.1} parent=0
    #allocation2 [shape = 'u8[2048]{0}', space=vmem, size = 0x800, scoped, tag = 'input window, operand 0, single buffered']
    #allocation3 [shape = 's32[1]{0}', space=sflag, size = 0x4, scoped, tag = 'scoped memory for tpu_custom_call.1']
    #allocation4 [shape = 's32[1]{0}', space=sflag, size = 0x4, scoped, tag = 'scoped memory for tpu_custom_call.1']
    #allocation5 [shape = 'u8[2048]{0}', space=vmem, size = 0x800, scoped, tag = 'output window, operand 0, single buffered']
    %7 = vsyncpa [#allocation3], 0
    %8 = vsyncpa [#allocation4], 0
    // Predicated region
    $region2: #{tpu_custom_call.1} parent=1 // pred_check
      _
    $region3: #{tpu_custom_call.1} parent=1 // pred_check_branch
      %10 = sbr.rel (0) target = $region5
    $region4: #{tpu_custom_call.1} parent=1 // pred_region
      %s12 = ssub.s32 64, 64
      %13 = vsyncadd [#allocation3], %s12
      %s15 = sshll.u32 [#allocation2], 4
      %s16 = int_to_ptr.vmem [resolvable:$true] %s15
      %18 = dma.hbm_to_vmem [thread:$0]  %s0, 64, %s16, [#allocation3]
    $region5: #{tpu_custom_call.1} parent=1 // pred_fallthru
      _
    // Predicated region
    $region6: #{tpu_custom_call.1} parent=1 // pred_check
      _
    $region7: #{tpu_custom_call.1} parent=1 // pred_check_branch
      %20 = sbr.rel (0) target = $region9
    $region8: #{tpu_custom_call.1} parent=1 // pred_region
      _
    $region9: #{tpu_custom_call.1} parent=1 // pred_fallthru
      _
    // Predicated region
    $region10: #{tpu_custom_call.1} parent=1 // pred_check
      _
    $region11: #{tpu_custom_call.1} parent=1 // pred_check_branch
      %22 = sbr.rel (0) target = $region13
    $region12: #{tpu_custom_call.1} parent=1 // pred_region
      %23 = dma.done [#allocation3], 64
    $region13: #{tpu_custom_call.1} parent=1 // pred_fallthru
      _
    %v24 = vld [vmem:[#allocation2] sm:$0xf]
    %v25 = vmul.f32 %v24, 5.656854
    %v26 = vld [vmem:[%s1] sm:$0x3]
    %v28 = vlaneseq
    %v29 = vshrl.u32 %v28, 7
    %v30 = vsub.s32 0, %v29
    %v31 = vrot.slane %v26, %v30
    %v32 = vlaneseq
    %v33 = vshrl.u32 %v32, 7
    %v34 = vsub.s32 1, %v33
    %v35 = vrot.slane %v26, %v34
    %v36 = vcombine.low %v31, %v35
    %v38 = vunpack.c.l.s4 1983009808
    %v39 = vunpack.c.0.s8 %v38
    %v40 = vlaneseq
    %v41 = vshrl.u32 %v40, 7
    %v42 = vsub.s32 %v39, %v41
    %v43 = vrot.slane %v36, %v42
    %v45 = vadd.f32 %v25, %v43
    %46 = vst [vmem:[#allocation5] sm:$0xf] %v45
    // Predicated region
    $region14: #{tpu_custom_call.1} parent=1 // pred_check
      _
    $region15: #{tpu_custom_call.1} parent=1 // pred_check_branch
      %48 = sbr.rel (0) target = $region17
    $region16: #{tpu_custom_call.1} parent=1 // pred_region
      %s50 = ssub.s32 64, 64
      %51 = vsyncadd [#allocation4], %s50
      %s53 = sshll.u32 [#allocation5], 4
      %s54 = int_to_ptr.vmem [resolvable:$true] %s53
      %56 = dma.vmem_to_hbm [thread:$0]  %s54, 64, %s2, [#allocation4]
    $region17: #{tpu_custom_call.1} parent=1 // pred_fallthru
      _
    // Predicated region
    $region18: #{tpu_custom_call.1} parent=1 // pred_check
      _
    $region19: #{tpu_custom_call.1} parent=1 // pred_check_branch
      %58 = sbr.rel (0) target = $region21
    $region20: #{tpu_custom_call.1} parent=1 // pred_region
      %59 = dma.done [#allocation4], 64
    $region21: #{tpu_custom_call.1} parent=1 // pred_fallthru
      _
    %60 = vsyncpa [#allocation3], 1
    %61 = vsyncpa [#allocation4], 1

</llo_original>
